<compile_context>
chip_gen: v5e
topology: v5e:2x2
jax: 0.10.0
libtpu: 0.0.40
codegen_flags: <defaults>
</compile_context>

<pallas_src>
import functools

import jax
import jax.numpy as jnp
from jax.experimental import pallas as pl
from jax.experimental.pallas import tpu as pltpu


def _round_up(a: int, m: int) -> int:
    return ((a + m - 1) // m) * m


def encoder_unit_kernel(x_ref, w1_ref, b1_ref, w2_ref, b2_ref, o_ref):
    # fc1 (bf16 x bf16 -> f32 accumulate on MXU) + bias + tanh in f32 (VPU/EUP)
    h = jnp.dot(x_ref[...], w1_ref[...], preferred_element_type=jnp.float32)
    h = jnp.tanh(h + b1_ref[...])                 # b1 is (1, hidden) -> broadcasts over rows
    # single narrowing cast right before the 2nd dot (keeps elementwise math f32 on v5e)
    h = h.astype(w2_ref.dtype)
    # fc2 + bias + tanh
    y = jnp.dot(h, w2_ref[...], preferred_element_type=jnp.float32)
    y = jnp.tanh(y + b2_ref[...])                 # b2 is (1, out)
    # TODO(synk): OUT=32 (<128 lanes) forces masked partial stores; only fixable by stacking
    # multiple encoder heads along the output feature dim, which a single EncoderUnit lacks.
    o_ref[...] = y.astype(o_ref.dtype)


@functools.partial(jax.jit, static_argnames=("max_tile",))
def encoder_unit(x, w1_t, b1, w2_t, b2, *, max_tile: int = 512):
    """x: [B, in] f32; w1_t: [in, hidden]; b1: [hidden]; w2_t: [hidden, out]; b2: [out]."""
    B, in_f = x.shape
    hidden = w1_t.shape[1]
    out_f = w2_t.shape[1]

    # ---- batch tiling: big tiles (>=128 rows when possible), pad B up to a multiple of TB ----
    tb = max_tile if B >= max_tile else _round_up(B, 8)
    tb = min(tb, max_tile)
    b_pad = _round_up(B, tb)
    if b_pad != B:
        x = jnp.pad(x, ((0, b_pad - B), (0, 0)))
    grid = (b_pad // tb,)

    # ---- bf16 matmul inputs (halves HBM->VMEM bytes, native MXU path on v6e/v7x) ----
    x_bf = x.astype(jnp.bfloat16)
    w1_bf = w1_t.astype(jnp.bfloat16)
    w2_bf = w2_t.astype(jnp.bfloat16)
    b1_2d = b1.reshape(1, hidden).astype(jnp.float32)
    b2_2d = b2.reshape(1, out_f).astype(jnp.float32)

    out = pl.pallas_call(
        encoder_unit_kernel,
        out_shape=jax.ShapeDtypeStruct((b_pad, out_f), jnp.float32),
        grid=grid,
        in_specs=[
            pl.BlockSpec((tb, in_f), lambda i: (i, 0)),        # x: tiled over batch
            pl.BlockSpec((in_f, hidden), lambda i: (0, 0)),    # W1: VMEM-resident
            pl.BlockSpec((1, hidden), lambda i: (0, 0)),       # b1: VMEM-resident
            pl.BlockSpec((hidden, out_f), lambda i: (0, 0)),   # W2: VMEM-resident
            pl.BlockSpec((1, out_f), lambda i: (0, 0)),        # b2: VMEM-resident
        ],
        out_specs=pl.BlockSpec((tb, out_f), lambda i: (i, 0)),
        compiler_params=pltpu.CompilerParams(
            dimension_semantics=("parallel",)),                # megacore sharding on v7x
    )(x_bf, w1_bf, b1_2d, w2_bf, b2_2d)

    return out[:B] if b_pad != B else out


if __name__ == "__main__":
    # config: encoderInputSize=32, encoderHiddenLayerSize=64, encoderOutputSize=32
    B, IN, HID, OUT = 1000, 32, 64, 32   # B=1000 exercises both tiling (TB=512) and padding
    key = jax.random.PRNGKey(0)
    kx, kw1, kb1, kw2, kb2 = jax.random.split(key, 5)

    x = jax.random.normal(kx, (B, IN), dtype=jnp.float32)

    # Deterministic init mirroring initParameters(initFunc, std=0.03) with normal init.
    # PyTorch Linear weight shape is (out, in); pass the transpose to the kernel wrapper.
    w1 = 0.03 * jax.random.normal(kw1, (HID, IN), dtype=jnp.float32)
    b1 = 0.03 * jax.random.normal(kb1, (HID,), dtype=jnp.float32)
    w2 = 0.03 * jax.random.normal(kw2, (OUT, HID), dtype=jnp.float32)
    b2 = 0.03 * jax.random.normal(kb2, (OUT,), dtype=jnp.float32)

    out = encoder_unit(x, w1.T, b1, w2.T, b2)
    out = jax.block_until_ready(out)
    assert out.shape == (B, OUT)

    # Reference 1: mirrors the kernel's mixed precision exactly (bf16 operands, f32 accumulate).
    x_bf, w1_bf, w2_bf = (a.astype(jnp.bfloat16) for a in (x, w1.T, w2.T))
    h_ref = jnp.tanh(jnp.dot(x_bf, w1_bf, preferred_element_type=jnp.float32) + b1)
    ref_mp = jnp.tanh(
        jnp.dot(h_ref.astype(jnp.bfloat16), w2_bf, preferred_element_type=jnp.float32) + b2)
    assert jnp.allclose(out, ref_mp, atol=1e-4, rtol=1e-4), "mixed-precision mismatch"

    # Reference 2: pure f32 PyTorch-equivalent forward (loose tolerance for bf16 inputs).
    ref_f32 = jnp.tanh(jnp.tanh(x @ w1.T + b1) @ w2.T + b2)
    assert jnp.allclose(out, ref_f32, atol=2e-2, rtol=2e-2), "semantic mismatch vs f32 reference"

    print("KERNEL_OK")
</pallas_src>

<mosaic_0001>
module attributes {stable_mosaic.version = 11 : i64} {
  func.func @encoder_unit_kernel(%arg0: i32, %arg1: memref<512x32xbf16, #tpu.memory_space<vmem>>, %arg2: memref<32x64xbf16, #tpu.memory_space<vmem>>, %arg3: memref<1x64xf32, #tpu.memory_space<vmem>>, %arg4: memref<64x32xbf16, #tpu.memory_space<vmem>>, %arg5: memref<1x32xf32, #tpu.memory_space<vmem>>, %arg6: memref<512x32xf32, #tpu.memory_space<vmem>>) attributes {dimension_semantics = [#tpu.dimension_semantics<parallel>], iteration_bounds = array<i64: 2>, scalar_prefetch = 0 : i64, scratch_operands = 0 : i64, tpu.core_type = #tpu.core_type<tc>, window_params = [{transform_indices = @transform_0, window_bounds = array<i64: 512, 32>}, {pipeline_mode = #tpu.pipeline_mode<synchronous>, transform_indices = @transform_1, window_bounds = array<i64: 32, 64>}, {pipeline_mode = #tpu.pipeline_mode<synchronous>, transform_indices = @transform_2, window_bounds = array<i64: 1, 64>}, {pipeline_mode = #tpu.pipeline_mode<synchronous>, transform_indices = @transform_3, window_bounds = array<i64: 64, 32>}, {pipeline_mode = #tpu.pipeline_mode<synchronous>, transform_indices = @transform_4, window_bounds = array<i64: 1, 32>}, {transform_indices = @transform_5, window_bounds = array<i64: 512, 32>}]} {
    %c0 = arith.constant 0 : index
    %c0_0 = arith.constant 0 : index
    %0 = vector.load %arg1[%c0, %c0_0] : memref<512x32xbf16, #tpu.memory_space<vmem>>, vector<512x32xbf16>
    %c0_1 = arith.constant 0 : index
    %c0_2 = arith.constant 0 : index
    %1 = vector.load %arg2[%c0_1, %c0_2] : memref<32x64xbf16, #tpu.memory_space<vmem>>, vector<32x64xbf16>
    %cst = arith.constant dense<0.000000e+00> : vector<512x64xf32>
    %2 = tpu.matmul %0, %1, %cst {dimension_numbers = #tpu.dot_dimension_numbers<[1], [0], [0], [1], [0, 0, 1, 1], [], []>} : vector<512x32xbf16>, vector<32x64xbf16>, vector<512x64xf32> -> vector<512x64xf32>
    %c0_3 = arith.constant 0 : index
    %c0_4 = arith.constant 0 : index
    %3 = vector.load %arg3[%c0_3, %c0_4] : memref<1x64xf32, #tpu.memory_space<vmem>>, vector<1x64xf32>
    %4 = vector.broadcast %3 : vector<1x64xf32> to vector<512x64xf32>
    %5 = arith.addf %2, %4 : vector<512x64xf32>
    %6 = math.tanh %5 : vector<512x64xf32>
    %7 = arith.truncf %6 : vector<512x64xf32> to vector<512x64xbf16>
    %c0_5 = arith.constant 0 : index
    %c0_6 = arith.constant 0 : index
    %8 = vector.load %arg4[%c0_5, %c0_6] : memref<64x32xbf16, #tpu.memory_space<vmem>>, vector<64x32xbf16>
    %cst_7 = arith.constant dense<0.000000e+00> : vector<512x32xf32>
    %9 = tpu.matmul %7, %8, %cst_7 {dimension_numbers = #tpu.dot_dimension_numbers<[1], [0], [0], [1], [0, 0, 1, 1], [], []>} : vector<512x64xbf16>, vector<64x32xbf16>, vector<512x32xf32> -> vector<512x32xf32>
    %c0_8 = arith.constant 0 : index
    %c0_9 = arith.constant 0 : index
    %10 = vector.load %arg5[%c0_8, %c0_9] : memref<1x32xf32, #tpu.memory_space<vmem>>, vector<1x32xf32>
    %11 = vector.broadcast %10 : vector<1x32xf32> to vector<512x32xf32>
    %12 = arith.addf %9, %11 : vector<512x32xf32>
    %13 = math.tanh %12 : vector<512x32xf32>
    %c0_10 = arith.constant 0 : index
    %c0_11 = arith.constant 0 : index
    %14 = vector.load %arg6[%c0_10, %c0_11] : memref<512x32xf32, #tpu.memory_space<vmem>>, vector<512x32xf32>
    tpu.vector_store %arg6[%c0_10, %c0_11], %13 {strides = array<i32>} : memref<512x32xf32, #tpu.memory_space<vmem>>, vector<512x32xf32>,
    return
  }
  func.func @transform_0(%arg0: i32) -> (i32, i32) {
    %c0_i32 = arith.constant 0 : i32
    %c0_i32_0 = arith.constant 0 : i32
    return %arg0, %c0_i32 : i32, i32
  }
  func.func @transform_1(%arg0: i32) -> (i32, i32) {
    %c0_i32 = arith.constant 0 : i32
    %c0_i32_0 = arith.constant 0 : i32
    %c0_i32_1 = arith.constant 0 : i32
    return %c0_i32, %c0_i32_0 : i32, i32
  }
  func.func @transform_2(%arg0: i32) -> (i32, i32) {
    %c0_i32 = arith.constant 0 : i32
    %c0_i32_0 = arith.constant 0 : i32
    %c0_i32_1 = arith.constant 0 : i32
    return %c0_i32, %c0_i32_0 : i32, i32
  }
  func.func @transform_3(%arg0: i32) -> (i32, i32) {
    %c0_i32 = arith.constant 0 : i32
    %c0_i32_0 = arith.constant 0 : i32
    %c0_i32_1 = arith.constant 0 : i32
    return %c0_i32, %c0_i32_0 : i32, i32
  }
  func.func @transform_4(%arg0: i32) -> (i32, i32) {
    %c0_i32 = arith.constant 0 : i32
    %c0_i32_0 = arith.constant 0 : i32
    %c0_i32_1 = arith.constant 0 : i32
    return %c0_i32, %c0_i32_0 : i32, i32
  }
  func.func @transform_5(%arg0: i32) -> (i32, i32) {
    %c0_i32 = arith.constant 0 : i32
    %c0_i32_0 = arith.constant 0 : i32
    return %arg0, %c0_i32 : i32, i32
  }
}

</mosaic_0001>

<llo_original>
// kernel: encoder_unit.1
$region0: #{encoder_unit.1}
  #allocation0 [shape = 'u32[]', space=smem, size = 0x4, offset = 0x4, fixed_abs, tag = 'smem constant byte address 0x4 - core index']
  #allocation1 [shape = 'u32[72,128]{1,0:T(1,128)}', space=vmem, size = 0x9000, scoped, tag = 'internal scratch']
  %s0 = inlined_call_operand.vmem [shape: bf16[1024,32], index: 0, kind: input, shape index: {}]
  %s1 = inlined_call_operand.vmem [shape: bf16[32,64], index: 1, kind: input, shape index: {}]
  %s2 = inlined_call_operand.vmem [shape: f32[1,64], index: 2, kind: input, shape index: {}]
  %s3 = inlined_call_operand.vmem [shape: bf16[64,32], index: 3, kind: input, shape index: {}]
  %s4 = inlined_call_operand.vmem [shape: f32[1,32], index: 4, kind: input, shape index: {}]
  %s5 = inlined_call_operand.vmem [shape: f32[1024,32], index: 5, kind: output, shape index: {}]
  %s6 = sld [smem:[#allocation0]]
  $region53: #{encoder_unit.1} parent=0
    _
  %s8 = ssub.s32 1, %s6
  %s9 = scalar_select 0, %s8, %s6
  loop: start=0, step=1, limit=4
  $region2: #{encoder_unit.1} parent=0 // loop_pre_header
    _
  $region3: #{encoder_unit.1} parent=0 // loop_header
    %s11 = sphi 0, %s15
    %p12 = scmp.ge.s32.totalorder %s11, 4
    %s21 = sphi 0, %s23
    %s24 = sphi 0, %s21
    %s25 = sphi 0, %s24
    %s41 = sphi 0, %s25
    %s45 = sphi 0, %s45
    %s47 = sphi 0, %s45
    %s48 = sphi 0, %s47
    %s62 = sphi 0, %s48
    %s66 = sphi 0, %s66
    %s68 = sphi 0, %s66
    %s69 = sphi 0, %s68
    %s83 = sphi 0, %s69
    %s87 = sphi 0, %s87
    %s89 = sphi 0, %s87
    %s90 = sphi 0, %s89
    %s104 = sphi 0, %s90
    %s108 = sphi 0, %s108
    %s110 = sphi 0, %s108
    %s111 = sphi 0, %s110
    %s125 = sphi 0, %s111
    %s131 = sphi 0, %s133
    %s134 = sphi 0, %s131
    %s135 = sphi 0, %s134
    %s151 = sphi 0, %s135
  $region4: #{encoder_unit.1} parent=0 // loop_header_branch
    %14 = sbr.rel (%p12) target = $region8
  $region5: #{encoder_unit.1} parent=0 // loop_body
    %s16 = ssub.s32 %s11, 1
    %s17 = ssub.s32 %s11, 2
    %s18 = sadd.s32 %s11, 1
    %s19 = ssub.s32 %s11, %s18
    %p20 = scmp.eq.s32.totalorder %s19, 0
    %s22 = sadd.s32 %s21, 1
    %s23 = scalar_select %p20, %s21, %s22
    %p26 = pneg %p20
    %p27 = scmp.eq.s32.totalorder %s11, 1
    %p28 = por %p26, %p27
    %p29 = scmp.ne.s32.totalorder %s21, %s24
    %p30 = scmp.eq.s32.totalorder %s11, 0
    %p31 = por %p29, %p30
    %p32 = scmp.ne.s32.totalorder %s21, %s24
    %p33 = scmp.eq.s32.totalorder %s16, 1
    %p34 = por %p32, %p33
    %p35 = scmp.ne.s32.totalorder %s24, %s25
    %p36 = scmp.eq.s32.totalorder %s16, 0
    %p37 = por %p35, %p36
    %p38 = scmp.ne.s32.totalorder %s24, %s25
    %p39 = scmp.eq.s32.totalorder %s17, 1
    %p40 = por %p38, %p39
    %p42 = scmp.ne.s32.totalorder %s25, %s41
    %p43 = scmp.eq.s32.totalorder %s17, 0
    %p44 = por %p42, %p43
    %s46 = sadd.s32 %s45, 1
    %p49 = scmp.eq.s32.totalorder %s11, 1
    %p50 = scmp.ne.s32.totalorder %s45, %s47
    %p51 = scmp.eq.s32.totalorder %s11, 0
    %p52 = por %p50, %p51
    %p53 = scmp.ne.s32.totalorder %s45, %s47
    %p54 = scmp.eq.s32.totalorder %s16, 1
    %p55 = por %p53, %p54
    %p56 = scmp.ne.s32.totalorder %s47, %s48
    %p57 = scmp.eq.s32.totalorder %s16, 0
    %p58 = por %p56, %p57
    %p59 = scmp.ne.s32.totalorder %s47, %s48
    %p60 = scmp.eq.s32.totalorder %s17, 1
    %p61 = por %p59, %p60
    %p63 = scmp.ne.s32.totalorder %s48, %s62
    %p64 = scmp.eq.s32.totalorder %s17, 0
    %p65 = por %p63, %p64
    %s67 = sadd.s32 %s66, 1
    %p70 = scmp.eq.s32.totalorder %s11, 1
    %p71 = scmp.ne.s32.totalorder %s66, %s68
    %p72 = scmp.eq.s32.totalorder %s11, 0
    %p73 = por %p71, %p72
    %p74 = scmp.ne.s32.totalorder %s66, %s68
    %p75 = scmp.eq.s32.totalorder %s16, 1
    %p76 = por %p74, %p75
    %p77 = scmp.ne.s32.totalorder %s68, %s69
    %p78 = scmp.eq.s32.totalorder %s16, 0
    %p79 = por %p77, %p78
    %p80 = scmp.ne.s32.totalorder %s68, %s69
    %p81 = scmp.eq.s32.totalorder %s17, 1
    %p82 = por %p80, %p81
    %p84 = scmp.ne.s32.totalorder %s69, %s83
    %p85 = scmp.eq.s32.totalorder %s17, 0
    %p86 = por %p84, %p85
    %s88 = sadd.s32 %s87, 1
    %p91 = scmp.eq.s32.totalorder %s11, 1
    %p92 = scmp.ne.s32.totalorder %s87, %s89
    %p93 = scmp.eq.s32.totalorder %s11, 0
    %p94 = por %p92, %p93
    %p95 = scmp.ne.s32.totalorder %s87, %s89
    %p96 = scmp.eq.s32.totalorder %s16, 1
    %p97 = por %p95, %p96
    %p98 = scmp.ne.s32.totalorder %s89, %s90
    %p99 = scmp.eq.s32.totalorder %s16, 0
    %p100 = por %p98, %p99
    %p101 = scmp.ne.s32.totalorder %s89, %s90
    %p102 = scmp.eq.s32.totalorder %s17, 1
    %p103 = por %p101, %p102
    %p105 = scmp.ne.s32.totalorder %s90, %s104
    %p106 = scmp.eq.s32.totalorder %s17, 0
    %p107 = por %p105, %p106
    %s109 = sadd.s32 %s108, 1
    %p112 = scmp.eq.s32.totalorder %s11, 1
    %p113 = scmp.ne.s32.totalorder %s108, %s110
    %p114 = scmp.eq.s32.totalorder %s11, 0
    %p115 = por %p113, %p114
    %p116 = scmp.ne.s32.totalorder %s108, %s110
    %p117 = scmp.eq.s32.totalorder %s16, 1
    %p118 = por %p116, %p117
    %p119 = scmp.ne.s32.totalorder %s110, %s111
    %p120 = scmp.eq.s32.totalorder %s16, 0
    %p121 = por %p119, %p120
    %p122 = scmp.ne.s32.totalorder %s110, %s111
    %p123 = scmp.eq.s32.totalorder %s17, 1
    %p124 = por %p122, %p123
    %p126 = scmp.ne.s32.totalorder %s111, %s125
    %p127 = scmp.eq.s32.totalorder %s17, 0
    %p128 = por %p126, %p127
    %s129 = ssub.s32 %s11, %s18
    %p130 = scmp.eq.s32.totalorder %s129, 0
    %s132 = sadd.s32 %s131, 1
    %s133 = scalar_select %p130, %s131, %s132
    %p136 = pneg %p130
    %p137 = scmp.eq.s32.totalorder %s11, 1
    %p138 = por %p136, %p137
    %p139 = scmp.ne.s32.totalorder %s131, %s134
    %p140 = scmp.eq.s32.totalorder %s11, 0
    %p141 = por %p139, %p140
    %p142 = scmp.ne.s32.totalorder %s131, %s134
    %p143 = scmp.eq.s32.totalorder %s16, 1
    %p144 = por %p142, %p143
    %p145 = scmp.ne.s32.totalorder %s134, %s135
    %p146 = scmp.eq.s32.totalorder %s16, 0
    %p147 = por %p145, %p146
    %p148 = scmp.ne.s32.totalorder %s134, %s135
    %p149 = scmp.eq.s32.totalorder %s17, 1
    %p150 = por %p148, %p149
    %p152 = scmp.ne.s32.totalorder %s135, %s151
    %p153 = scmp.eq.s32.totalorder %s17, 0
    %p154 = por %p152, %p153
    %p155 = scmp.le.s32.totalorder 1, %s11
    %p156 = scmp.lt.s32.totalorder %s11, 3
    %p157 = pnand %p155, %p156
    %p158 = pneg %p157
    // Predicated region
    $region9: #{encoder_unit.1} parent=5 // pred_check
      _
    $region10: #{encoder_unit.1} parent=5 // pred_check_branch
      %160 = sbr.rel (%p157) target = $region12
    $region11: #{encoder_unit.1} parent=5 // pred_region
      %s161 = ssub.s32 %s11, 1
      // Predicated region
      $region13: #{encoder_unit.1} parent=11 // pred_check
        %p162 = pneg %p58
      $region14: #{encoder_unit.1} parent=11 // pred_check_branch
        %164 = sbr.rel (%p162) target = $region16
      $region15: #{encoder_unit.1} parent=11 // pred_region
        _
      $region16: #{encoder_unit.1} parent=11 // pred_fallthru
        _
      // Predicated region
      $region17: #{encoder_unit.1} parent=11 // pred_check
        %p165 = pneg %p79
      $region18: #{encoder_unit.1} parent=11 // pred_check_branch
        %167 = sbr.rel (%p165) target = $region20
      $region19: #{encoder_unit.1} parent=11 // pred_region
        _
      $region20: #{encoder_unit.1} parent=11 // pred_fallthru
        _
      // Predicated region
      $region21: #{encoder_unit.1} parent=11 // pred_check
        %p168 = pneg %p100
      $region22: #{encoder_unit.1} parent=11 // pred_check_branch
        %170 = sbr.rel (%p168) target = $region24
      $region23: #{encoder_unit.1} parent=11 // pred_region
        _
      $region24: #{encoder_unit.1} parent=11 // pred_fallthru
        _
      // Predicated region
      $region25: #{encoder_unit.1} parent=11 // pred_check
        %p171 = pneg %p121
      $region26: #{encoder_unit.1} parent=11 // pred_check_branch
        %173 = sbr.rel (%p171) target = $region28
      $region27: #{encoder_unit.1} parent=11 // pred_region
        _
      $region28: #{encoder_unit.1} parent=11 // pred_fallthru
        _
    $region12: #{encoder_unit.1} parent=5 // pred_fallthru
      _
    %p174 = scmp.lt.s32.totalorder %s11, 2
    // Predicated region
    $region29: #{encoder_unit.1} parent=5 // pred_check
      %p175 = pneg %p174
    $region30: #{encoder_unit.1} parent=5 // pred_check_branch
      %177 = sbr.rel (%p175) target = $region32
    $region31: #{encoder_unit.1} parent=5 // pred_region
      // Predicated region
      $region33: #{encoder_unit.1} parent=31 // pred_check
        %p178 = pneg %p31
      $region34: #{encoder_unit.1} parent=31 // pred_check_branch
        %180 = sbr.rel (%p178) target = $region36
      $region35: #{encoder_unit.1} parent=31 // pred_region
        %s181 = smul.u32 64, %s11
        %p182 = scmp.lt.s32.totalorder %s181, 127
        %s183 = scalar_select %p182, %s181, 127
        %s184 = smul.addr %s183, 4
        %s185 = scalar_lea.vmem %s0, %s184
        %s186 = smul.u32 64, %s11
      $region36: #{encoder_unit.1} parent=31 // pred_fallthru
        _
    $region32: #{encoder_unit.1} parent=5 // pred_fallthru
      _
    %p187 = scmp.le.s32.totalorder 1, %s11
    %p188 = scmp.lt.s32.totalorder %s11, 3
    %p189 = pnand %p187, %p188
    %p190 = pneg %p189
    // Predicated region
    $region37: #{encoder_unit.1} parent=5 // pred_check
      _
    $region38: #{encoder_unit.1} parent=5 // pred_check_branch
      %192 = sbr.rel (%p189) target = $region40
    $region39: #{encoder_unit.1} parent=5 // pred_region
      %s193 = ssub.s32 %s11, 1
      %s194 = smul.u32 64, %s16
      %p195 = scmp.lt.s32.totalorder %s194, 127
      %s196 = scalar_select %p195, %s194, 127
      %s197 = smul.addr %s196, 4
      %s198 = scalar_lea.vmem %s0, %s197
      %p199 = pneg %p37
      %p200 = pneg %p34
      %p201 = pneg %p58
      %p202 = pneg %p55
      %p203 = pneg %p79
      %p204 = pneg %p76
      %p205 = pneg %p100
      %p206 = pneg %p97
      %p207 = pneg %p121
      %p208 = pneg %p118
      %p209 = pneg %p147
      %p210 = pneg %p144
      %s211 = smul.u32 64, %s16
      %p212 = scmp.lt.s32.totalorder %s211, 127
      %s213 = scalar_select %p212, %s211, 127
      %s214 = smul.addr %s213, 8
      %s215 = scalar_lea.vmem %s5, %s214
      %s216 = smul.u32 64, %s16
      %p217 = scmp.lt.s32.totalorder %s216, 127
      %s218 = scalar_select %p217, %s216, 127
      %s219 = smul.addr %s218, 4
      %s220 = scalar_lea.vmem %s0, %s219
      %s221 = smul.u32 64, %s16
      %s222 = smul.u32 64, %s16
      %p223 = scmp.lt.s32.totalorder %s222, 127
      %s224 = scalar_select %p223, %s222, 127
      %s225 = smul.addr %s224, 8
      %s226 = scalar_lea.vmem %s5, %s225
      %s227 = smul.u32 64, %s16
      %v229 = vld [vmem:[%s220] sm:$0xf]
      %v230 = vld [vmem:[%s220 + $0x4] sm:$0xf]
      %v231 = vld [vmem:[%s220 + $0x8] sm:$0xf]
      %v232 = vld [vmem:[%s220 + $0xc] sm:$0xf]
      %v233 = vld [vmem:[%s220 + $0x10] sm:$0xf]
      %v234 = vld [vmem:[%s220 + $0x14] sm:$0xf]
      %v235 = vld [vmem:[%s220 + $0x18] sm:$0xf]
      %v236 = vld [vmem:[%s220 + $0x1c] sm:$0xf]
      %v237 = vld [vmem:[%s220 + $0x20] sm:$0xf]
      %v238 = vld [vmem:[%s220 + $0x24] sm:$0xf]
      %v239 = vld [vmem:[%s220 + $0x28] sm:$0xf]
      %v240 = vld [vmem:[%s220 + $0x2c] sm:$0xf]
      %v241 = vld [vmem:[%s220 + $0x30] sm:$0xf]
      %v242 = vld [vmem:[%s220 + $0x34] sm:$0xf]
      %v243 = vld [vmem:[%s220 + $0x38] sm:$0xf]
      %v244 = vld [vmem:[%s220 + $0x3c] sm:$0xf]
      %v245 = vld [vmem:[%s220 + $0x40] sm:$0xf]
      %v246 = vld [vmem:[%s220 + $0x44] sm:$0xf]
      %v247 = vld [vmem:[%s220 + $0x48] sm:$0xf]
      %v248 = vld [vmem:[%s220 + $0x4c] sm:$0xf]
      %v249 = vld [vmem:[%s220 + $0x50] sm:$0xf]
      %v250 = vld [vmem:[%s220 + $0x54] sm:$0xf]
      %v251 = vld [vmem:[%s220 + $0x58] sm:$0xf]
      %v252 = vld [vmem:[%s220 + $0x5c] sm:$0xf]
      %v253 = vld [vmem:[%s220 + $0x60] sm:$0xf]
      %v254 = vld [vmem:[%s220 + $0x64] sm:$0xf]
      %v255 = vld [vmem:[%s220 + $0x68] sm:$0xf]
      %v256 = vld [vmem:[%s220 + $0x6c] sm:$0xf]
      %v257 = vld [vmem:[%s220 + $0x70] sm:$0xf]
      %v258 = vld [vmem:[%s220 + $0x74] sm:$0xf]
      %v259 = vld [vmem:[%s220 + $0x78] sm:$0xf]
      %v260 = vld [vmem:[%s220 + $0x7c] sm:$0xf]
      %v261 = vld [vmem:[%s220 + $0x80] sm:$0xf]
      %v262 = vld [vmem:[%s220 + $0x84] sm:$0xf]
      %v263 = vld [vmem:[%s220 + $0x88] sm:$0xf]
      %v264 = vld [vmem:[%s220 + $0x8c] sm:$0xf]
      %v265 = vld [vmem:[%s220 + $0x90] sm:$0xf]
      %v266 = vld [vmem:[%s220 + $0x94] sm:$0xf]
      %v267 = vld [vmem:[%s220 + $0x98] sm:$0xf]
      %v268 = vld [vmem:[%s220 + $0x9c] sm:$0xf]
      %v269 = vld [vmem:[%s220 + $0xa0] sm:$0xf]
      %v270 = vld [vmem:[%s220 + $0xa4] sm:$0xf]
      %v271 = vld [vmem:[%s220 + $0xa8] sm:$0xf]
      %v272 = vld [vmem:[%s220 + $0xac] sm:$0xf]
      %v273 = vld [vmem:[%s220 + $0xb0] sm:$0xf]
      %v274 = vld [vmem:[%s220 + $0xb4] sm:$0xf]
      %v275 = vld [vmem:[%s220 + $0xb8] sm:$0xf]
      %v276 = vld [vmem:[%s220 + $0xbc] sm:$0xf]
      %v277 = vld [vmem:[%s220 + $0xc0] sm:$0xf]
      %v278 = vld [vmem:[%s220 + $0xc4] sm:$0xf]
      %v279 = vld [vmem:[%s220 + $0xc8] sm:$0xf]
      %v280 = vld [vmem:[%s220 + $0xcc] sm:$0xf]
      %v281 = vld [vmem:[%s220 + $0xd0] sm:$0xf]
      %v282 = vld [vmem:[%s220 + $0xd4] sm:$0xf]
      %v283 = vld [vmem:[%s220 + $0xd8] sm:$0xf]
      %v284 = vld [vmem:[%s220 + $0xdc] sm:$0xf]
      %v285 = vld [vmem:[%s220 + $0xe0] sm:$0xf]
      %v286 = vld [vmem:[%s220 + $0xe4] sm:$0xf]
      %v287 = vld [vmem:[%s220 + $0xe8] sm:$0xf]
      %v288 = vld [vmem:[%s220 + $0xec] sm:$0xf]
      %v289 = vld [vmem:[%s220 + $0xf0] sm:$0xf]
      %v290 = vld [vmem:[%s220 + $0xf4] sm:$0xf]
      %v291 = vld [vmem:[%s220 + $0xf8] sm:$0xf]
      %v292 = vld [vmem:[%s220 + $0xfc] sm:$0xf]
      %v293 = vld [vmem:[%s1] sm:$0xf]
      %v294 = vld [vmem:[%s1 + $0x4] sm:$0xf]
      %v295 = vld [vmem:[%s1 + $0x8] sm:$0xf]
      %v296 = vld [vmem:[%s1 + $0xc] sm:$0xf]
      %v297 = vld [vmem:[%s2] sm:$0x1]
      %v299 = vperm.slane %v297, 0
      %v365 = vunpack.c.l.b16 %v229
      %v366 = vunpack.c.l.b16 %v230
      %v367 = vunpack.c.l.b16 %v231
      %v368 = vunpack.c.l.b16 %v232
      %v369 = vunpack.c.l.b16 %v233
      %v370 = vunpack.c.l.b16 %v234
      %v371 = vunpack.c.l.b16 %v235
      %v372 = vunpack.c.l.b16 %v236
      %v373 = vunpack.c.l.b16 %v237
      %v374 = vunpack.c.l.b16 %v238
      %v375 = vunpack.c.l.b16 %v239
      %v376 = vunpack.c.l.b16 %v240
      %v377 = vunpack.c.l.b16 %v241
      %v378 = vunpack.c.l.b16 %v242
      %v379 = vunpack.c.l.b16 %v243
      %v380 = vunpack.c.l.b16 %v244
      %v381 = vunpack.c.l.b16 %v245
      %v382 = vunpack.c.l.b16 %v246
      %v383 = vunpack.c.l.b16 %v247
      %v384 = vunpack.c.l.b16 %v248
      %v385 = vunpack.c.l.b16 %v249
      %v386 = vunpack.c.l.b16 %v250
      %v387 = vunpack.c.l.b16 %v251
      %v388 = vunpack.c.l.b16 %v252
      %v389 = vunpack.c.l.b16 %v253
      %v390 = vunpack.c.l.b16 %v254
      %v391 = vunpack.c.l.b16 %v255
      %v392 = vunpack.c.l.b16 %v256
      %v393 = vunpack.c.l.b16 %v257
      %v394 = vunpack.c.l.b16 %v258
      %v395 = vunpack.c.l.b16 %v259
      %v396 = vunpack.c.l.b16 %v260
      %v397 = vunpack.c.l.b16 %v261
      %v398 = vunpack.c.l.b16 %v262
      %v399 = vunpack.c.l.b16 %v263
      %v400 = vunpack.c.l.b16 %v264
      %v401 = vunpack.c.l.b16 %v265
      %v402 = vunpack.c.l.b16 %v266
      %v403 = vunpack.c.l.b16 %v267
      %v404 = vunpack.c.l.b16 %v268
      %v405 = vunpack.c.l.b16 %v269
      %v406 = vunpack.c.l.b16 %v270
      %v407 = vunpack.c.l.b16 %v271
      %v408 = vunpack.c.l.b16 %v272
      %v409 = vunpack.c.l.b16 %v273
      %v410 = vunpack.c.l.b16 %v274
      %v411 = vunpack.c.l.b16 %v275
      %v412 = vunpack.c.l.b16 %v276
      %v413 = vunpack.c.l.b16 %v277
      %v414 = vunpack.c.l.b16 %v278
      %v415 = vunpack.c.l.b16 %v279
      %v416 = vunpack.c.l.b16 %v280
      %v417 = vunpack.c.l.b16 %v281
      %v418 = vunpack.c.l.b16 %v282
      %v419 = vunpack.c.l.b16 %v283
      %v420 = vunpack.c.l.b16 %v284
      %v421 = vunpack.c.l.b16 %v285
      %v422 = vunpack.c.l.b16 %v286
      %v423 = vunpack.c.l.b16 %v287
      %v424 = vunpack.c.l.b16 %v288
      %v425 = vunpack.c.l.b16 %v289
      %v426 = vunpack.c.l.b16 %v290
      %v427 = vunpack.c.l.b16 %v291
      %v428 = vunpack.c.l.b16 %v292
      %v429 = vpack.c.b16 %v366, %v365
      %v430 = vpack.c.b16 %v368, %v367
      %v431 = vpack.c.b16 %v370, %v369
      %v432 = vpack.c.b16 %v372, %v371
      %v433 = vpack.c.b16 %v374, %v373
      %v434 = vpack.c.b16 %v376, %v375
      %v435 = vpack.c.b16 %v378, %v377
      %v436 = vpack.c.b16 %v380, %v379
      %v437 = vpack.c.b16 %v382, %v381
      %v438 = vpack.c.b16 %v384, %v383
      %v439 = vpack.c.b16 %v386, %v385
      %v440 = vpack.c.b16 %v388, %v387
      %v441 = vpack.c.b16 %v390, %v389
      %v442 = vpack.c.b16 %v392, %v391
      %v443 = vpack.c.b16 %v394, %v393
      %v444 = vpack.c.b16 %v396, %v395
      %v445 = vpack.c.b16 %v398, %v397
      %v446 = vpack.c.b16 %v400, %v399
      %v447 = vpack.c.b16 %v402, %v401
      %v448 = vpack.c.b16 %v404, %v403
      %v449 = vpack.c.b16 %v406, %v405
      %v450 = vpack.c.b16 %v408, %v407
      %v451 = vpack.c.b16 %v410, %v409
      %v452 = vpack.c.b16 %v412, %v411
      %v453 = vpack.c.b16 %v414, %v413
      %v454 = vpack.c.b16 %v416, %v415
      %v455 = vpack.c.b16 %v418, %v417
      %v456 = vpack.c.b16 %v420, %v419
      %v457 = vpack.c.b16 %v422, %v421
      %v458 = vpack.c.b16 %v424, %v423
      %v459 = vpack.c.b16 %v426, %v425
      %v460 = vpack.c.b16 %v428, %v427
      %v465 = vunpack.c.l.b16 %v293
      %v466 = vunpack.c.l.b16 %v294
      %v467 = vunpack.c.l.b16 %v295
      %v468 = vunpack.c.l.b16 %v296
      %v469 = vpack.c.b16 %v466, %v465
      %v470 = vpack.c.b16 %v468, %v467
      %vm473 = vcmask 261120
      %v475 = vsel %vm473, %v429, 0
      %v478 = vsel %vm473, %v430, 0
      %v481 = vsel %vm473, %v431, 0
      %v484 = vsel %vm473, %v432, 0
      %v487 = vsel %vm473, %v433, 0
      %v490 = vsel %vm473, %v434, 0
      %v493 = vsel %vm473, %v435, 0
      %v496 = vsel %vm473, %v436, 0
      %v499 = vsel %vm473, %v437, 0
      %v502 = vsel %vm473, %v438, 0
      %v505 = vsel %vm473, %v439, 0
      %v508 = vsel %vm473, %v440, 0
      %v511 = vsel %vm473, %v441, 0
      %v514 = vsel %vm473, %v442, 0
      %v517 = vsel %vm473, %v443, 0
      %v520 = vsel %vm473, %v444, 0
      %v523 = vsel %vm473, %v445, 0
      %v526 = vsel %vm473, %v446, 0
      %v529 = vsel %vm473, %v447, 0
      %v532 = vsel %vm473, %v448, 0
      %v535 = vsel %vm473, %v449, 0
      %v538 = vsel %vm473, %v450, 0
      %v541 = vsel %vm473, %v451, 0
      %v544 = vsel %vm473, %v452, 0
      %v547 = vsel %vm473, %v453, 0
      %v550 = vsel %vm473, %v454, 0
      %v553 = vsel %vm473, %v455, 0
      %v556 = vsel %vm473, %v456, 0
      %v559 = vsel %vm473, %v457, 0
      %v562 = vsel %vm473, %v458, 0
      %v565 = vsel %vm473, %v459, 0
      %v568 = vsel %vm473, %v460, 0
      %570 = vmatpush.bf16.msra.mxu0 0
      %571 = vmatpush.bf16.msra.mxu0 0
      %572 = vmatpush.bf16.msra.mxu0 0
      %573 = vmatpush.bf16.msra.mxu0 0
      %574 = vmatpush.bf16.msra.mxu0 0
      %575 = vmatpush.bf16.msra.mxu0 0
      %576 = vmatpush.bf16.msra.mxu0 %v470
      %577 = vmatpush.bf16.msra.mxu0 %v469
      %578 = vmatmul.bf16.gmra.mxu0 %v475
      %v579 = vpop.f32.mrf.mxu0
      %v580 = vadd.f32 %v299, %v579
      %v581 = vpop.f32.mrf.mxu0
      %v582 = vadd.f32 %v299, %v581
      %583 = vmatmul.bf16.gmra.mxu0 %v478
      %v584 = vpop.f32.mrf.mxu0
      %v585 = vadd.f32 %v299, %v584
      %v586 = vpop.f32.mrf.mxu0
      %v587 = vadd.f32 %v299, %v586
      %588 = vmatmul.bf16.gmra.mxu0 %v481
      %v589 = vpop.f32.mrf.mxu0
      %v590 = vadd.f32 %v299, %v589
      %v591 = vpop.f32.mrf.mxu0
      %v592 = vadd.f32 %v299, %v591
      %593 = vmatmul.bf16.gmra.mxu0 %v484
      %v594 = vpop.f32.mrf.mxu0
      %v595 = vadd.f32 %v299, %v594
      %v596 = vpop.f32.mrf.mxu0
      %v597 = vadd.f32 %v299, %v596
      %598 = vmatmul.bf16.gmra.mxu0 %v487
      %v599 = vpop.f32.mrf.mxu0
      %v600 = vadd.f32 %v299, %v599
      %v601 = vpop.f32.mrf.mxu0
      %v602 = vadd.f32 %v299, %v601
      %603 = vmatmul.bf16.gmra.mxu0 %v490
      %v604 = vpop.f32.mrf.mxu0
      %v605 = vadd.f32 %v299, %v604
      %v606 = vpop.f32.mrf.mxu0
      %v607 = vadd.f32 %v299, %v606
      %608 = vmatmul.bf16.gmra.mxu0 %v493
      %v609 = vpop.f32.mrf.mxu0
      %v610 = vadd.f32 %v299, %v609
      %v611 = vpop.f32.mrf.mxu0
      %v612 = vadd.f32 %v299, %v611
      %613 = vmatmul.bf16.gmra.mxu0 %v496
      %v614 = vpop.f32.mrf.mxu0
      %v615 = vadd.f32 %v299, %v614
      %v616 = vpop.f32.mrf.mxu0
      %v617 = vadd.f32 %v299, %v616
      %618 = vmatmul.bf16.gmra.mxu0 %v499
      %v619 = vpop.f32.mrf.mxu0
      %v620 = vadd.f32 %v299, %v619
      %v621 = vpop.f32.mrf.mxu0
      %v622 = vadd.f32 %v299, %v621
      %623 = vmatmul.bf16.gmra.mxu0 %v502
      %v624 = vpop.f32.mrf.mxu0
      %v625 = vadd.f32 %v299, %v624
      %v626 = vpop.f32.mrf.mxu0
      %v627 = vadd.f32 %v299, %v626
      %628 = vmatmul.bf16.gmra.mxu0 %v505
      %v629 = vpop.f32.mrf.mxu0
      %v630 = vadd.f32 %v299, %v629
      %v631 = vpop.f32.mrf.mxu0
      %v632 = vadd.f32 %v299, %v631
      %633 = vmatmul.bf16.gmra.mxu0 %v508
      %v634 = vpop.f32.mrf.mxu0
      %v635 = vadd.f32 %v299, %v634
      %v636 = vpop.f32.mrf.mxu0
      %v637 = vadd.f32 %v299, %v636
      %638 = vmatmul.bf16.gmra.mxu0 %v511
      %v639 = vpop.f32.mrf.mxu0
      %v640 = vadd.f32 %v299, %v639
      %v641 = vpop.f32.mrf.mxu0
      %v642 = vadd.f32 %v299, %v641
      %643 = vmatmul.bf16.gmra.mxu0 %v514
      %v644 = vpop.f32.mrf.mxu0
      %v645 = vadd.f32 %v299, %v644
      %v646 = vpop.f32.mrf.mxu0
      %v647 = vadd.f32 %v299, %v646
      %648 = vmatmul.bf16.gmra.mxu0 %v517
      %v649 = vpop.f32.mrf.mxu0
      %v650 = vadd.f32 %v299, %v649
      %v651 = vpop.f32.mrf.mxu0
      %v652 = vadd.f32 %v299, %v651
      %653 = vmatmul.bf16.gmra.mxu0 %v520
      %v654 = vpop.f32.mrf.mxu0
      %v655 = vadd.f32 %v299, %v654
      %v656 = vpop.f32.mrf.mxu0
      %v657 = vadd.f32 %v299, %v656
      %658 = vmatmul.bf16.gmra.mxu0 %v523
      %v659 = vpop.f32.mrf.mxu0
      %v660 = vadd.f32 %v299, %v659
      %v661 = vpop.f32.mrf.mxu0
      %v662 = vadd.f32 %v299, %v661
      %663 = vmatmul.bf16.gmra.mxu0 %v526
      %v664 = vpop.f32.mrf.mxu0
      %v665 = vadd.f32 %v299, %v664
      %v666 = vpop.f32.mrf.mxu0
      %v667 = vadd.f32 %v299, %v666
      %668 = vmatmul.bf16.gmra.mxu0 %v529
      %v669 = vpop.f32.mrf.mxu0
      %v670 = vadd.f32 %v299, %v669
      %v671 = vpop.f32.mrf.mxu0
      %v672 = vadd.f32 %v299, %v671
      %673 = vmatmul.bf16.gmra.mxu0 %v532
      %v674 = vpop.f32.mrf.mxu0
      %v675 = vadd.f32 %v299, %v674
      %v676 = vpop.f32.mrf.mxu0
      %v677 = vadd.f32 %v299, %v676
      %678 = vmatmul.bf16.gmra.mxu0 %v535
      %v679 = vpop.f32.mrf.mxu0
      %v680 = vadd.f32 %v299, %v679
      %v681 = vpop.f32.mrf.mxu0
      %v682 = vadd.f32 %v299, %v681
      %683 = vmatmul.bf16.gmra.mxu0 %v538
      %v684 = vpop.f32.mrf.mxu0
      %v685 = vadd.f32 %v299, %v684
      %v686 = vpop.f32.mrf.mxu0
      %v687 = vadd.f32 %v299, %v686
      %688 = vmatmul.bf16.gmra.mxu0 %v541
      %v689 = vpop.f32.mrf.mxu0
      %v690 = vadd.f32 %v299, %v689
      %v691 = vpop.f32.mrf.mxu0
      %v692 = vadd.f32 %v299, %v691
      %693 = vmatmul.bf16.gmra.mxu0 %v544
      %v694 = vpop.f32.mrf.mxu0
      %v695 = vadd.f32 %v299, %v694
      %v696 = vpop.f32.mrf.mxu0
      %v697 = vadd.f32 %v299, %v696
      %698 = vmatmul.bf16.gmra.mxu0 %v547
      %v699 = vpop.f32.mrf.mxu0
      %v700 = vadd.f32 %v299, %v699
      %v701 = vpop.f32.mrf.mxu0
      %v702 = vadd.f32 %v299, %v701
      %703 = vmatmul.bf16.gmra.mxu0 %v550
      %v704 = vpop.f32.mrf.mxu0
      %v705 = vadd.f32 %v299, %v704
      %v706 = vpop.f32.mrf.mxu0
      %v707 = vadd.f32 %v299, %v706
      %708 = vmatmul.bf16.gmra.mxu0 %v553
      %v709 = vpop.f32.mrf.mxu0
      %v710 = vadd.f32 %v299, %v709
      %v711 = vpop.f32.mrf.mxu0
      %v712 = vadd.f32 %v299, %v711
      %713 = vmatmul.bf16.gmra.mxu0 %v556
      %v714 = vpop.f32.mrf.mxu0
      %v715 = vadd.f32 %v299, %v714
      %v716 = vpop.f32.mrf.mxu0
      %v717 = vadd.f32 %v299, %v716
      %718 = vmatmul.bf16.gmra.mxu0 %v559
      %v719 = vpop.f32.mrf.mxu0
      %v720 = vadd.f32 %v299, %v719
      %v721 = vpop.f32.mrf.mxu0
      %v722 = vadd.f32 %v299, %v721
      %723 = vmatmul.bf16.gmra.mxu0 %v562
      %v724 = vpop.f32.mrf.mxu0
      %v725 = vadd.f32 %v299, %v724
      %v726 = vpop.f32.mrf.mxu0
      %v727 = vadd.f32 %v299, %v726
      %728 = vmatmul.bf16.gmra.mxu0 %v565
      %v729 = vpop.f32.mrf.mxu0
      %v730 = vadd.f32 %v299, %v729
      %v731 = vpop.f32.mrf.mxu0
      %v732 = vadd.f32 %v299, %v731
      %733 = vmatmul.bf16.gmra.mxu0 %v568
      %v734 = vpop.f32.mrf.mxu0
      %v735 = vadd.f32 %v299, %v734
      %v736 = vpop.f32.mrf.mxu0
      %v737 = vadd.f32 %v299, %v736
      %738 = vdwg.mxu0
      %v739 = vtanh.pop %v580
      %v740 = vtanh.pop %v582
      %v741 = vtanh.pop %v585
      %v742 = vtanh.pop %v587
      %v743 = vtanh.pop %v590
      %v744 = vtanh.pop %v592
      %v745 = vtanh.pop %v595
      %v746 = vtanh.pop %v597
      %v747 = vtanh.pop %v600
      %v748 = vtanh.pop %v602
      %v749 = vtanh.pop %v605
      %v750 = vtanh.pop %v607
      %v751 = vtanh.pop %v610
      %v752 = vtanh.pop %v612
      %v753 = vtanh.pop %v615
      %v754 = vtanh.pop %v617
      %v755 = vtanh.pop %v620
      %v756 = vtanh.pop %v622
      %v757 = vtanh.pop %v625
      %v758 = vtanh.pop %v627
      %v759 = vtanh.pop %v630
      %v760 = vtanh.pop %v632
      %v761 = vtanh.pop %v635
      %v762 = vtanh.pop %v637
      %v763 = vtanh.pop %v640
      %v764 = vtanh.pop %v642
      %v765 = vtanh.pop %v645
      %v766 = vtanh.pop %v647
      %v767 = vtanh.pop %v650
      %v768 = vtanh.pop %v652
      %v769 = vtanh.pop %v655
      %v770 = vtanh.pop %v657
      %v771 = vtanh.pop %v660
      %v772 = vtanh.pop %v662
      %v773 = vtanh.pop %v665
      %v774 = vtanh.pop %v667
      %v775 = vtanh.pop %v670
      %v776 = vtanh.pop %v672
      %v777 = vtanh.pop %v675
      %v778 = vtanh.pop %v677
      %v779 = vtanh.pop %v680
      %v780 = vtanh.pop %v682
      %v781 = vtanh.pop %v685
      %v782 = vtanh.pop %v687
      %v783 = vtanh.pop %v690
      %v784 = vtanh.pop %v692
      %v785 = vtanh.pop %v695
      %v786 = vtanh.pop %v697
      %v787 = vtanh.pop %v700
      %v788 = vtanh.pop %v702
      %v789 = vtanh.pop %v705
      %v790 = vtanh.pop %v707
      %v791 = vtanh.pop %v710
      %v792 = vtanh.pop %v712
      %v793 = vtanh.pop %v715
      %v794 = vtanh.pop %v717
      %v795 = vtanh.pop %v720
      %v796 = vtanh.pop %v722
      %v797 = vtanh.pop %v725
      %v798 = vtanh.pop %v727
      %v799 = vtanh.pop %v730
      %v800 = vtanh.pop %v732
      %v801 = vtanh.pop %v735
      %v802 = vtanh.pop %v737
      %v803 = vpack.c.bf16 %v740, %v739
      %v804 = vpack.c.bf16 %v742, %v741
      %v805 = vpack.c.bf16 %v744, %v743
      %v806 = vpack.c.bf16 %v746, %v745
      %v807 = vpack.c.bf16 %v748, %v747
      %v808 = vpack.c.bf16 %v750, %v749
      %v809 = vpack.c.bf16 %v752, %v751
      %v810 = vpack.c.bf16 %v754, %v753
      %v811 = vpack.c.bf16 %v756, %v755
      %v812 = vpack.c.bf16 %v758, %v757
      %v813 = vpack.c.bf16 %v760, %v759
      %v814 = vpack.c.bf16 %v762, %v761
      %v815 = vpack.c.bf16 %v764, %v763
      %v816 = vpack.c.bf16 %v766, %v765
      %v817 = vpack.c.bf16 %v768, %v767
      %v818 = vpack.c.bf16 %v770, %v769
      %v819 = vpack.c.bf16 %v772, %v771
      %v820 = vpack.c.bf16 %v774, %v773
      %v821 = vpack.c.bf16 %v776, %v775
      %v822 = vpack.c.bf16 %v778, %v777
      %v823 = vpack.c.bf16 %v780, %v779
      %v824 = vpack.c.bf16 %v782, %v781
      %v825 = vpack.c.bf16 %v784, %v783
      %v826 = vpack.c.bf16 %v786, %v785
      %v827 = vpack.c.bf16 %v788, %v787
      %v828 = vpack.c.bf16 %v790, %v789
      %v829 = vpack.c.bf16 %v792, %v791
      %v830 = vpack.c.bf16 %v794, %v793
      %v831 = vpack.c.bf16 %v796, %v795
      %v832 = vpack.c.bf16 %v798, %v797
      %v833 = vpack.c.bf16 %v800, %v799
      %v834 = vpack.c.bf16 %v802, %v801
      %v835 = vld [vmem:[%s3] sm:$0xf]
      %v836 = vld [vmem:[%s3 + $0x4] sm:$0xf]
      %v837 = vld [vmem:[%s3 + $0x8] sm:$0xf]
      %v838 = vld [vmem:[%s3 + $0xc] sm:$0xf]
      %v839 = vld [vmem:[%s3 + $0x10] sm:$0xf]
      %v840 = vld [vmem:[%s3 + $0x14] sm:$0xf]
      %v841 = vld [vmem:[%s3 + $0x18] sm:$0xf]
      %v842 = vld [vmem:[%s3 + $0x1c] sm:$0xf]
      %v843 = vld [vmem:[%s4] sm:$0x1]
      %v845 = vperm.slane %v843, 0
      %v855 = vunpack.c.l.b16 %v835
      %v856 = vunpack.c.l.b16 %v836
      %v857 = vunpack.c.l.b16 %v837
      %v858 = vunpack.c.l.b16 %v838
      %v859 = vunpack.c.l.b16 %v839
      %v860 = vunpack.c.l.b16 %v840
      %v861 = vunpack.c.l.b16 %v841
      %v862 = vunpack.c.l.b16 %v842
      %v863 = vpack.c.b16 %v856, %v855
      %v864 = vpack.c.b16 %v858, %v857
      %v865 = vpack.c.b16 %v860, %v859
      %v866 = vpack.c.b16 %v862, %v861
      %vm871 = vcmask 523264
      %v873 = vsel %vm871, %v803, 0
      %v876 = vsel %vm871, %v804, 0
      %v879 = vsel %vm871, %v805, 0
      %v882 = vsel %vm871, %v806, 0
      %v885 = vsel %vm871, %v807, 0
      %v888 = vsel %vm871, %v808, 0
      %v891 = vsel %vm871, %v809, 0
      %v894 = vsel %vm871, %v810, 0
      %v897 = vsel %vm871, %v811, 0
      %v900 = vsel %vm871, %v812, 0
      %v903 = vsel %vm871, %v813, 0
      %v906 = vsel %vm871, %v814, 0
      %v909 = vsel %vm871, %v815, 0
      %v912 = vsel %vm871, %v816, 0
      %v915 = vsel %vm871, %v817, 0
      %v918 = vsel %vm871, %v818, 0
      %v921 = vsel %vm871, %v819, 0
      %v924 = vsel %vm871, %v820, 0
      %v927 = vsel %vm871, %v821, 0
      %v930 = vsel %vm871, %v822, 0
      %v933 = vsel %vm871, %v823, 0
      %v936 = vsel %vm871, %v824, 0
      %v939 = vsel %vm871, %v825, 0
      %v942 = vsel %vm871, %v826, 0
      %v945 = vsel %vm871, %v827, 0
      %v948 = vsel %vm871, %v828, 0
      %v951 = vsel %vm871, %v829, 0
      %v954 = vsel %vm871, %v830, 0
      %v957 = vsel %vm871, %v831, 0
      %v960 = vsel %vm871, %v832, 0
      %v963 = vsel %vm871, %v833, 0
      %v966 = vsel %vm871, %v834, 0
      %968 = vmatpush.bf16.msra.mxu0 0
      %969 = vmatpush.bf16.msra.mxu0 0
      %970 = vmatpush.bf16.msra.mxu0 0
      %971 = vmatpush.bf16.msra.mxu0 0
      %972 = vmatpush.bf16.msra.mxu0 %v866
      %973 = vmatpush.bf16.msra.mxu0 %v865
      %974 = vmatpush.bf16.msra.mxu0 %v864
      %975 = vmatpush.bf16.msra.mxu0 %v863
      %976 = vmatmul.bf16.gmra.mxu0 %v873
      %v977 = vpop.f32.mrf.mxu0
      %v978 = vadd.f32 %v845, %v977
      %v979 = vpop.f32.mrf.mxu0
      %v980 = vadd.f32 %v845, %v979
      %981 = vmatmul.bf16.gmra.mxu0 %v876
      %v982 = vpop.f32.mrf.mxu0
      %v983 = vadd.f32 %v845, %v982
      %v984 = vpop.f32.mrf.mxu0
      %v985 = vadd.f32 %v845, %v984
      %986 = vmatmul.bf16.gmra.mxu0 %v879
      %v987 = vpop.f32.mrf.mxu0
      %v988 = vadd.f32 %v845, %v987
      %v989 = vpop.f32.mrf.mxu0
      %v990 = vadd.f32 %v845, %v989
      %991 = vmatmul.bf16.gmra.mxu0 %v882
      %v992 = vpop.f32.mrf.mxu0
      %v993 = vadd.f32 %v845, %v992
      %v994 = vpop.f32.mrf.mxu0
      %v995 = vadd.f32 %v845, %v994
      %996 = vmatmul.bf16.gmra.mxu0 %v885
      %v997 = vpop.f32.mrf.mxu0
      %v998 = vadd.f32 %v845, %v997
      %v999 = vpop.f32.mrf.mxu0
      %v1000 = vadd.f32 %v845, %v999
      %1001 = vmatmul.bf16.gmra.mxu0 %v888
      %v1002 = vpop.f32.mrf.mxu0
      %v1003 = vadd.f32 %v845, %v1002
      %v1004 = vpop.f32.mrf.mxu0
      %v1005 = vadd.f32 %v845, %v1004
      %1006 = vmatmul.bf16.gmra.mxu0 %v891
      %v1007 = vpop.f32.mrf.mxu0
      %v1008 = vadd.f32 %v845, %v1007
      %v1009 = vpop.f32.mrf.mxu0
      %v1010 = vadd.f32 %v845, %v1009
      %1011 = vmatmul.bf16.gmra.mxu0 %v894
      %v1012 = vpop.f32.mrf.mxu0
      %v1013 = vadd.f32 %v845, %v1012
      %v1014 = vpop.f32.mrf.mxu0
      %v1015 = vadd.f32 %v845, %v1014
      %1016 = vmatmul.bf16.gmra.mxu0 %v897
      %v1017 = vpop.f32.mrf.mxu0
      %v1018 = vadd.f32 %v845, %v1017
      %v1019 = vpop.f32.mrf.mxu0
      %v1020 = vadd.f32 %v845, %v1019
      %1021 = vmatmul.bf16.gmra.mxu0 %v900
      %v1022 = vpop.f32.mrf.mxu0
      %v1023 = vadd.f32 %v845, %v1022
      %v1024 = vpop.f32.mrf.mxu0
      %v1025 = vadd.f32 %v845, %v1024
      %1026 = vmatmul.bf16.gmra.mxu0 %v903
      %v1027 = vpop.f32.mrf.mxu0
      %v1028 = vadd.f32 %v845, %v1027
      %v1029 = vpop.f32.mrf.mxu0
      %v1030 = vadd.f32 %v845, %v1029
      %1031 = vmatmul.bf16.gmra.mxu0 %v906
      %v1032 = vpop.f32.mrf.mxu0
      %v1033 = vadd.f32 %v845, %v1032
      %v1034 = vpop.f32.mrf.mxu0
      %v1035 = vadd.f32 %v845, %v1034
      %1036 = vmatmul.bf16.gmra.mxu0 %v909
      %v1037 = vpop.f32.mrf.mxu0
      %v1038 = vadd.f32 %v845, %v1037
      %v1039 = vpop.f32.mrf.mxu0
      %v1040 = vadd.f32 %v845, %v1039
      %1041 = vmatmul.bf16.gmra.mxu0 %v912
      %v1042 = vpop.f32.mrf.mxu0
      %v1043 = vadd.f32 %v845, %v1042
      %v1044 = vpop.f32.mrf.mxu0
      %v1045 = vadd.f32 %v845, %v1044
      %1046 = vmatmul.bf16.gmra.mxu0 %v915
      %v1047 = vpop.f32.mrf.mxu0
      %v1048 = vadd.f32 %v845, %v1047
      %v1049 = vpop.f32.mrf.mxu0
      %v1050 = vadd.f32 %v845, %v1049
      %1051 = vmatmul.bf16.gmra.mxu0 %v918
      %v1052 = vpop.f32.mrf.mxu0
      %v1053 = vadd.f32 %v845, %v1052
      %v1054 = vpop.f32.mrf.mxu0
      %v1055 = vadd.f32 %v845, %v1054
      %1056 = vmatmul.bf16.gmra.mxu0 %v921
      %v1057 = vpop.f32.mrf.mxu0
      %v1058 = vadd.f32 %v845, %v1057
      %v1059 = vpop.f32.mrf.mxu0
      %v1060 = vadd.f32 %v845, %v1059
      %1061 = vmatmul.bf16.gmra.mxu0 %v924
      %v1062 = vpop.f32.mrf.mxu0
      %v1063 = vadd.f32 %v845, %v1062
      %v1064 = vpop.f32.mrf.mxu0
      %v1065 = vadd.f32 %v845, %v1064
      %1066 = vmatmul.bf16.gmra.mxu0 %v927
      %v1067 = vpop.f32.mrf.mxu0
      %v1068 = vadd.f32 %v845, %v1067
      %v1069 = vpop.f32.mrf.mxu0
      %v1070 = vadd.f32 %v845, %v1069
      %1071 = vmatmul.bf16.gmra.mxu0 %v930
      %v1072 = vpop.f32.mrf.mxu0
      %v1073 = vadd.f32 %v845, %v1072
      %v1074 = vpop.f32.mrf.mxu0
      %v1075 = vadd.f32 %v845, %v1074
      %1076 = vmatmul.bf16.gmra.mxu0 %v933
      %v1077 = vpop.f32.mrf.mxu0
      %v1078 = vadd.f32 %v845, %v1077
      %v1079 = vpop.f32.mrf.mxu0
      %v1080 = vadd.f32 %v845, %v1079
      %1081 = vmatmul.bf16.gmra.mxu0 %v936
      %v1082 = vpop.f32.mrf.mxu0
      %v1083 = vadd.f32 %v845, %v1082
      %v1084 = vpop.f32.mrf.mxu0
      %v1085 = vadd.f32 %v845, %v1084
      %1086 = vmatmul.bf16.gmra.mxu0 %v939
      %v1087 = vpop.f32.mrf.mxu0
      %v1088 = vadd.f32 %v845, %v1087
      %v1089 = vpop.f32.mrf.mxu0
      %v1090 = vadd.f32 %v845, %v1089
      %1091 = vmatmul.bf16.gmra.mxu0 %v942
      %v1092 = vpop.f32.mrf.mxu0
      %v1093 = vadd.f32 %v845, %v1092
      %v1094 = vpop.f32.mrf.mxu0
      %v1095 = vadd.f32 %v845, %v1094
      %1096 = vmatmul.bf16.gmra.mxu0 %v945
      %v1097 = vpop.f32.mrf.mxu0
      %v1098 = vadd.f32 %v845, %v1097
      %v1099 = vpop.f32.mrf.mxu0
      %v1100 = vadd.f32 %v845, %v1099
      %1101 = vmatmul.bf16.gmra.mxu0 %v948
      %v1102 = vpop.f32.mrf.mxu0
      %v1103 = vadd.f32 %v845, %v1102
      %v1104 = vpop.f32.mrf.mxu0
      %v1105 = vadd.f32 %v845, %v1104
      %1106 = vmatmul.bf16.gmra.mxu0 %v951
      %v1107 = vpop.f32.mrf.mxu0
      %v1108 = vadd.f32 %v845, %v1107
      %v1109 = vpop.f32.mrf.mxu0
      %v1110 = vadd.f32 %v845, %v1109
      %1111 = vmatmul.bf16.gmra.mxu0 %v954
      %v1112 = vpop.f32.mrf.mxu0
      %v1113 = vadd.f32 %v845, %v1112
      %v1114 = vpop.f32.mrf.mxu0
      %v1115 = vadd.f32 %v845, %v1114
      %1116 = vmatmul.bf16.gmra.mxu0 %v957
      %v1117 = vpop.f32.mrf.mxu0
      %v1118 = vadd.f32 %v845, %v1117
      %v1119 = vpop.f32.mrf.mxu0
      %v1120 = vadd.f32 %v845, %v1119
      %1121 = vmatmul.bf16.gmra.mxu0 %v960
      %v1122 = vpop.f32.mrf.mxu0
      %v1123 = vadd.f32 %v845, %v1122
      %v1124 = vpop.f32.mrf.mxu0
      %v1125 = vadd.f32 %v845, %v1124
      %1126 = vmatmul.bf16.gmra.mxu0 %v963
      %v1127 = vpop.f32.mrf.mxu0
      %v1128 = vadd.f32 %v845, %v1127
      %v1129 = vpop.f32.mrf.mxu0
      %v1130 = vadd.f32 %v845, %v1129
      %1131 = vmatmul.bf16.gmra.mxu0 %v966
      %v1132 = vpop.f32.mrf.mxu0
      %v1133 = vadd.f32 %v845, %v1132
      %v1134 = vpop.f32.mrf.mxu0
      %v1135 = vadd.f32 %v845, %v1134
      %1136 = vdwg.mxu0
      %v1137 = vtanh.pop %v978
      %v1138 = vtanh.pop %v980
      %v1139 = vtanh.pop %v983
      %v1140 = vtanh.pop %v985
      %v1141 = vtanh.pop %v988
      %v1142 = vtanh.pop %v990
      %v1143 = vtanh.pop %v993
      %v1144 = vtanh.pop %v995
      %v1145 = vtanh.pop %v998
      %v1146 = vtanh.pop %v1000
      %v1147 = vtanh.pop %v1003
      %v1148 = vtanh.pop %v1005
      %v1149 = vtanh.pop %v1008
      %v1150 = vtanh.pop %v1010
      %v1151 = vtanh.pop %v1013
      %v1152 = vtanh.pop %v1015
      %v1153 = vtanh.pop %v1018
      %v1154 = vtanh.pop %v1020
      %v1155 = vtanh.pop %v1023
      %v1156 = vtanh.pop %v1025
      %v1157 = vtanh.pop %v1028
      %v1158 = vtanh.pop %v1030
      %v1159 = vtanh.pop %v1033
      %v1160 = vtanh.pop %v1035
      %v1161 = vtanh.pop %v1038
      %v1162 = vtanh.pop %v1040
      %v1163 = vtanh.pop %v1043
      %v1164 = vtanh.pop %v1045
      %v1165 = vtanh.pop %v1048
      %v1166 = vtanh.pop %v1050
      %v1167 = vtanh.pop %v1053
      %v1168 = vtanh.pop %v1055
      %v1169 = vtanh.pop %v1058
      %v1170 = vtanh.pop %v1060
      %v1171 = vtanh.pop %v1063
      %v1172 = vtanh.pop %v1065
      %v1173 = vtanh.pop %v1068
      %v1174 = vtanh.pop %v1070
      %v1175 = vtanh.pop %v1073
      %v1176 = vtanh.pop %v1075
      %v1177 = vtanh.pop %v1078
      %v1178 = vtanh.pop %v1080
      %v1179 = vtanh.pop %v1083
      %v1180 = vtanh.pop %v1085
      %v1181 = vtanh.pop %v1088
      %v1182 = vtanh.pop %v1090
      %v1183 = vtanh.pop %v1093
      %v1184 = vtanh.pop %v1095
      %v1185 = vtanh.pop %v1098
      %v1186 = vtanh.pop %v1100
      %v1187 = vtanh.pop %v1103
      %v1188 = vtanh.pop %v1105
      %v1189 = vtanh.pop %v1108
      %v1190 = vtanh.pop %v1110
      %v1191 = vtanh.pop %v1113
      %v1192 = vtanh.pop %v1115
      %v1193 = vtanh.pop %v1118
      %v1194 = vtanh.pop %v1120
      %v1195 = vtanh.pop %v1123
      %v1196 = vtanh.pop %v1125
      %v1197 = vtanh.pop %v1128
      %v1198 = vtanh.pop %v1130
      %v1199 = vtanh.pop %v1133
      %v1200 = vtanh.pop %v1135
      %1201 = vst.msk [vmem:[%s226] sm:$0xff] %vm473, %v1137
      %1202 = vst.msk [vmem:[%s226 + $0x8] sm:$0xff] %vm473, %v1138
      %1203 = vst.msk [vmem:[%s226 + $0x10] sm:$0xff] %vm473, %v1139
      %1204 = vst.msk [vmem:[%s226 + $0x18] sm:$0xff] %vm473, %v1140
      %1205 = vst.msk [vmem:[%s226 + $0x20] sm:$0xff] %vm473, %v1141
      %1206 = vst.msk [vmem:[%s226 + $0x28] sm:$0xff] %vm473, %v1142
      %1207 = vst.msk [vmem:[%s226 + $0x30] sm:$0xff] %vm473, %v1143
      %1208 = vst.msk [vmem:[%s226 + $0x38] sm:$0xff] %vm473, %v1144
      %1209 = vst.msk [vmem:[%s226 + $0x40] sm:$0xff] %vm473, %v1145
      %1210 = vst.msk [vmem:[%s226 + $0x48] sm:$0xff] %vm473, %v1146
      %1211 = vst.msk [vmem:[%s226 + $0x50] sm:$0xff] %vm473, %v1147
      %1212 = vst.msk [vmem:[%s226 + $0x58] sm:$0xff] %vm473, %v1148
      %1213 = vst.msk [vmem:[%s226 + $0x60] sm:$0xff] %vm473, %v1149
      %1214 = vst.msk [vmem:[%s226 + $0x68] sm:$0xff] %vm473, %v1150
      %1215 = vst.msk [vmem:[%s226 + $0x70] sm:$0xff] %vm473, %v1151
      %1216 = vst.msk [vmem:[%s226 + $0x78] sm:$0xff] %vm473, %v1152
      %1217 = vst.msk [vmem:[%s226 + $0x80] sm:$0xff] %vm473, %v1153
      %1218 = vst.msk [vmem:[%s226 + $0x88] sm:$0xff] %vm473, %v1154
      %1219 = vst.msk [vmem:[%s226 + $0x90] sm:$0xff] %vm473, %v1155
      %1220 = vst.msk [vmem:[%s226 + $0x98] sm:$0xff] %vm473, %v1156
      %1221 = vst.msk [vmem:[%s226 + $0xa0] sm:$0xff] %vm473, %v1157
      %1222 = vst.msk [vmem:[%s226 + $0xa8] sm:$0xff] %vm473, %v1158
      %1223 = vst.msk [vmem:[%s226 + $0xb0] sm:$0xff] %vm473, %v1159
      %1224 = vst.msk [vmem:[%s226 + $0xb8] sm:$0xff] %vm473, %v1160
      %1225 = vst.msk [vmem:[%s226 + $0xc0] sm:$0xff] %vm473, %v1161
      %1226 = vst.msk [vmem:[%s226 + $0xc8] sm:$0xff] %vm473, %v1162
      %1227 = vst.msk [vmem:[%s226 + $0xd0] sm:$0xff] %vm473, %v1163
      %1228 = vst.msk [vmem:[%s226 + $0xd8] sm:$0xff] %vm473, %v1164
      %1229 = vst.msk [vmem:[%s226 + $0xe0] sm:$0xff] %vm473, %v1165
      %1230 = vst.msk [vmem:[%s226 + $0xe8] sm:$0xff] %vm473, %v1166
      %1231 = vst.msk [vmem:[%s226 + $0xf0] sm:$0xff] %vm473, %v1167
      %1232 = vst.msk [vmem:[%s226 + $0xf8] sm:$0xff] %vm473, %v1168
      %1233 = vst.msk [vmem:[%s226 + $0x100] sm:$0xff] %vm473, %v1169
      %1234 = vst.msk [vmem:[%s226 + $0x108] sm:$0xff] %vm473, %v1170
      %1235 = vst.msk [vmem:[%s226 + $0x110] sm:$0xff] %vm473, %v1171
      %1236 = vst.msk [vmem:[%s226 + $0x118] sm:$0xff] %vm473, %v1172
      %1237 = vst.msk [vmem:[%s226 + $0x120] sm:$0xff] %vm473, %v1173
      %1238 = vst.msk [vmem:[%s226 + $0x128] sm:$0xff] %vm473, %v1174
      %1239 = vst.msk [vmem:[%s226 + $0x130] sm:$0xff] %vm473, %v1175
      %1240 = vst.msk [vmem:[%s226 + $0x138] sm:$0xff] %vm473, %v1176
      %1241 = vst.msk [vmem:[%s226 + $0x140] sm:$0xff] %vm473, %v1177
      %1242 = vst.msk [vmem:[%s226 + $0x148] sm:$0xff] %vm473, %v1178
      %1243 = vst.msk [vmem:[%s226 + $0x150] sm:$0xff] %vm473, %v1179
      %1244 = vst.msk [vmem:[%s226 + $0x158] sm:$0xff] %vm473, %v1180
      %1245 = vst.msk [vmem:[%s226 + $0x160] sm:$0xff] %vm473, %v1181
      %1246 = vst.msk [vmem:[%s226 + $0x168] sm:$0xff] %vm473, %v1182
      %1247 = vst.msk [vmem:[%s226 + $0x170] sm:$0xff] %vm473, %v1183
      %1248 = vst.msk [vmem:[%s226 + $0x178] sm:$0xff] %vm473, %v1184
      %1249 = vst.msk [vmem:[%s226 + $0x180] sm:$0xff] %vm473, %v1185
      %1250 = vst.msk [vmem:[%s226 + $0x188] sm:$0xff] %vm473, %v1186
      %1251 = vst.msk [vmem:[%s226 + $0x190] sm:$0xff] %vm473, %v1187
      %1252 = vst.msk [vmem:[%s226 + $0x198] sm:$0xff] %vm473, %v1188
      %1253 = vst.msk [vmem:[%s226 + $0x1a0] sm:$0xff] %vm473, %v1189
      %1254 = vst.msk [vmem:[%s226 + $0x1a8] sm:$0xff] %vm473, %v1190
      %1255 = vst.msk [vmem:[%s226 + $0x1b0] sm:$0xff] %vm473, %v1191
      %1256 = vst.msk [vmem:[%s226 + $0x1b8] sm:$0xff] %vm473, %v1192
      %1257 = vst.msk [vmem:[%s226 + $0x1c0] sm:$0xff] %vm473, %v1193
      %1258 = vst.msk [vmem:[%s226 + $0x1c8] sm:$0xff] %vm473, %v1194
      %1259 = vst.msk [vmem:[%s226 + $0x1d0] sm:$0xff] %vm473, %v1195
      %1260 = vst.msk [vmem:[%s226 + $0x1d8] sm:$0xff] %vm473, %v1196
      %1261 = vst.msk [vmem:[%s226 + $0x1e0] sm:$0xff] %vm473, %v1197
      %1262 = vst.msk [vmem:[%s226 + $0x1e8] sm:$0xff] %vm473, %v1198
      %1263 = vst.msk [vmem:[%s226 + $0x1f0] sm:$0xff] %vm473, %v1199
      %1264 = vst.msk [vmem:[%s226 + $0x1f8] sm:$0xff] %vm473, %v1200
      %s1265 = smul.u32 64, %s16
      %p1266 = scmp.lt.s32.totalorder %s1265, 127
      %s1267 = scalar_select %p1266, %s1265, 127
      %s1268 = smul.addr %s1267, 8
      %s1269 = scalar_lea.vmem %s5, %s1268
      // Predicated region
      $region41: #{encoder_unit.1} parent=39 // pred_check
        %p1270 = pneg %p144
      $region42: #{encoder_unit.1} parent=39 // pred_check_branch
        %1272 = sbr.rel (%p1270) target = $region44
      $region43: #{encoder_unit.1} parent=39 // pred_region
        %s1273 = smul.u32 64, %s16
      $region44: #{encoder_unit.1} parent=39 // pred_fallthru
        _
    $region40: #{encoder_unit.1} parent=5 // pred_fallthru
      _
    %p1274 = scmp.le.s32.totalorder 2, %s11
    // Predicated region
    $region45: #{encoder_unit.1} parent=5 // pred_check
      %p1275 = pneg %p1274
    $region46: #{encoder_unit.1} parent=5 // pred_check_branch
      %1277 = sbr.rel (%p1275) target = $region48
    $region47: #{encoder_unit.1} parent=5 // pred_region
      %s1278 = ssub.s32 %s11, 2
      // Predicated region
      $region49: #{encoder_unit.1} parent=47 // pred_check
        %p1279 = pneg %p150
      $region50: #{encoder_unit.1} parent=47 // pred_check_branch
        %1281 = sbr.rel (%p1279) target = $region52
      $region51: #{encoder_unit.1} parent=47 // pred_region
        %s1282 = smul.u32 64, %s17
        %p1283 = scmp.lt.s32.totalorder %s1282, 127
        %s1284 = scalar_select %p1283, %s1282, 127
        %s1285 = smul.addr %s1284, 8
        %s1286 = scalar_lea.vmem %s5, %s1285
      $region52: #{encoder_unit.1} parent=47 // pred_fallthru
        _
    $region48: #{encoder_unit.1} parent=5 // pred_fallthru
      _
  $region6: #{encoder_unit.1} parent=0 // loop_footer
    %s15 = sadd.s32 1, %s11
  $region7: #{encoder_unit.1} parent=0 // loop_footer_branch
    %10 = sbr.rel target = $region3
  $region8: #{encoder_unit.1} parent=0 // loop_exit
    _

</llo_original>
